<compile_context>
chip_gen: v5e
topology: v5e:2x2
jax: 0.10.0
libtpu: 0.0.40
codegen_flags: <defaults>
</compile_context>

<pallas_src>
import numpy as np
import jax
import jax.numpy as jnp
from jax.experimental import pallas as pl
from jax.experimental.pallas import tpu as pltpu

# Fixed module hyper-parameters (from the PyTorch spec).
CIN1, WIN1 = 20, 13        # fc output viewed as (20 channels, 1, 13)
CMID, WOUT1 = 20, 26       # deconv1 output width: (13-1)*2 - 2*1 + 3 + 1 = 26
K = 3                      # kernel width of both deconvs
WOUT2 = 101                # deconv2 output width: (26-1)*4 - 2*1 + 3 + 0 = 101
WPAD = 128                 # width padded to one full lane tile (sliced back to 101 outside)


# ----------------------------- Pallas kernel --------------------------------

def output_reshape_kernel(x_ref, a_ref, b1_ref, w2_ref, b2_ref, o_ref):
    """x:(B,F) f32 | a:(F,520) bf16 | b1:(1,520) f32 | w2:(520,cout*128) bf16 |
       b2:(1,cout*128) f32   ->   o:(B,cout*128) f32."""
    x = x_ref[...].astype(jnp.bfloat16)
    # fused fc + deconv1: one lane-dense MXU matmul (f32 accumulation), f32 bias, ReLU.
    h = jnp.dot(x, a_ref[...], preferred_element_type=jnp.float32)       # (B, 520)
    h = jnp.maximum(h + b1_ref[...], 0.0).astype(jnp.bfloat16)
    # deconv2: block-structured matmul straight into the final (co, width) lane layout.
    z = jnp.dot(h, w2_ref[...], preferred_element_type=jnp.float32)      # (B, cout*128)
    o_ref[...] = jnp.maximum(z + b2_ref[...], 0.0)                       # + bias2, ReLU


def run_output_reshape(x, a2d, bias1, w2big, bias2):
    B, F = x.shape
    k1 = a2d.shape[1]              # 26*20 = 520
    d2 = w2big.shape[1]            # cout * WPAD
    cout = d2 // WPAD

    flops = 2 * B * (F * k1 + k1 * d2)
    bytes_accessed = (x.size * x.dtype.itemsize
                      + a2d.size * a2d.dtype.itemsize
                      + bias1.size * bias1.dtype.itemsize
                      + w2big.size * w2big.dtype.itemsize
                      + bias2.size * bias2.dtype.itemsize
                      + B * d2 * 4)

    out = pl.pallas_call(
        output_reshape_kernel,
        out_shape=jax.ShapeDtypeStruct((B, d2), jnp.float32),
        in_specs=[pl.BlockSpec(memory_space=pltpu.MemorySpace.VMEM)] * 5,
        out_specs=pl.BlockSpec(memory_space=pltpu.MemorySpace.VMEM),
        cost_estimate=pl.CostEstimate(flops=flops, transcendentals=0,
                                      bytes_accessed=bytes_accessed),
    )(x, a2d, bias1, w2big, bias2)

    # layout plumbing: free reshape + one slice back to NCHW (B, cout, 1, 101).
    y = out.reshape(B, cout, WPAD)[:, :, :WOUT2]
    return y.reshape(B, cout, 1, WOUT2)


# ------------------------- offline parameter fusion --------------------------

def build_fused_params(w_fc, b_fc, w1, b1, w2, b2):
    """Fold fc -> view -> deconv1 into a single (F, 520) matrix + f32 bias, and express
    deconv2 as a (520, cout*128) block-structured matrix whose columns are already the
    final (channel, padded-width) output layout."""
    w_fc = np.asarray(w_fc, np.float64); b_fc = np.asarray(b_fc, np.float64)
    w1 = np.asarray(w1, np.float64);     b1 = np.asarray(b1, np.float64)
    w2 = np.asarray(w2, np.float64);     b2 = np.asarray(b2, np.float64)
    F = w_fc.shape[1]
    cout = w2.shape[1]

    # deconv1 as a linear map M1[j=(ci*13+iw), g, cm]; g = 2*iw - 1 + k (stride 2, pad 1).
    M1 = np.zeros((CIN1 * WIN1, WOUT1, CMID))
    for ci in range(CIN1):
        for iw in range(WIN1):
            for k in range(K):
                g = iw * 2 - 1 + k
                if 0 <= g < WOUT1:
                    M1[ci * WIN1 + iw, g, :] += w1[ci, :, 0, k]

    # fuse fc into deconv1 (exact: no activation in between).
    A = np.einsum('jf,jgc->gfc', w_fc, M1)                        # (26, F, 20)
    bias1 = np.einsum('j,jgc->gc', b_fc, M1) + b1[None, :]        # (26, 20)
    a2d = np.ascontiguousarray(np.transpose(A, (1, 0, 2))).reshape(F, WOUT1 * CMID)
    b1_2d = bias1.reshape(1, WOUT1 * CMID)                        # f32 bias, added in-kernel

    # deconv2 (stride 4, pad 1, K=3) as a block-structured matrix:
    # row (g*20 + c)  x  column (co*128 + ow), with ow = 4*g - 1 + k.  Columns ow % 4 == 2
    # and ow >= 101 stay zero (bias-only / padding, sliced away in the wrapper).
    w2big = np.zeros((WOUT1 * CMID, cout * WPAD))
    for g in range(WOUT1):
        for k in range(K):
            ow = 4 * g - 1 + k
            if 0 <= ow < WPAD:
                for co in range(cout):
                    w2big[g * CMID:(g + 1) * CMID, co * WPAD + ow] = w2[:, co, 0, k]
    b2_2d = np.repeat(b2, WPAD)[None, :]                          # (1, cout*128)

    return (jnp.asarray(a2d, jnp.bfloat16),
            jnp.asarray(b1_2d, jnp.float32),
            jnp.asarray(w2big, jnp.bfloat16),
            jnp.asarray(b2_2d, jnp.float32))


# ------------------------------ pure reference -------------------------------

def ref_deconv1d(x, w, b, stride, pad, outpad):
    """x: (B, Cin, Win); w: (Cin, Cout, 1, K); returns (B, Cout, Wout)."""
    B, cin, win = x.shape
    cout, kk = w.shape[1], w.shape[3]
    wout = (win - 1) * stride - 2 * pad + kk + outpad
    y = np.zeros((B, cout, wout), dtype=np.float64)
    xn = np.asarray(x, np.float64)
    wn = np.asarray(w, np.float64)
    for bi in range(B):
        for ci in range(cin):
            for iw in range(win):
                for k in range(kk):
                    ow = iw * stride - pad + k
                    if 0 <= ow < wout:
                        y[bi, :, ow] += xn[bi, ci, iw] * wn[ci, :, 0, k]
    return y + np.asarray(b, np.float64)[None, :, None]


def ref_forward(x, w_fc, b_fc, w1, b1, w2, b2, cout):
    xn = np.asarray(x, np.float64)
    h = xn @ np.asarray(w_fc, np.float64).T + np.asarray(b_fc, np.float64)
    h = h.reshape(-1, 20, 13)                                                   # (B, 20, 13)
    h = np.maximum(ref_deconv1d(h, w1, b1, stride=2, pad=1, outpad=1), 0.0)     # (B, 20, 26)
    h = np.maximum(ref_deconv1d(h, w2, b2, stride=4, pad=1, outpad=0), 0.0)     # (B, cout, 101)
    return h.reshape(h.shape[0], cout, 1, h.shape[-1])


# ----------------------------------- main ------------------------------------

if __name__ == "__main__":
    B = 2
    INPUT_FEATURES = 32
    OUTPUT_CHANNELS = 4

    key = jax.random.PRNGKey(0)
    k_x, k_wfc, k_bfc, k_w1, k_b1, k_w2, k_b2 = jax.random.split(key, 7)

    x = jax.random.normal(k_x, (B, INPUT_FEATURES), jnp.float32)

    # synthetic parameters (shapes follow nn.Linear / nn.ConvTranspose2d)
    w_fc = jax.random.normal(k_wfc, (260, INPUT_FEATURES), jnp.float32) * 0.1
    b_fc = jax.random.normal(k_bfc, (260,), jnp.float32) * 0.1
    w1 = jax.random.normal(k_w1, (20, 20, 1, 3), jnp.float32) * 0.1             # (Cin, Cout, kH, kW)
    b1 = jax.random.normal(k_b1, (20,), jnp.float32) * 0.1
    w2 = jax.random.normal(k_w2, (20, OUTPUT_CHANNELS, 1, 3), jnp.float32) * 0.1
    b2 = jax.random.normal(k_b2, (OUTPUT_CHANNELS,), jnp.float32) * 0.1

    a2d, bias1, w2big, bias2 = build_fused_params(w_fc, b_fc, w1, b1, w2, b2)

    out = jax.jit(run_output_reshape)(x, a2d, bias1, w2big, bias2)
    out = jax.block_until_ready(out)

    expected = ref_forward(x, w_fc, b_fc, w1, b1, w2, b2, OUTPUT_CHANNELS)
    assert out.shape == (B, OUTPUT_CHANNELS, 1, WOUT2), out.shape
    # bf16 matmul operands (f32 accumulation, f32 biases) -> mildly relaxed tolerance.
    np.testing.assert_allclose(np.asarray(out, np.float64), expected, rtol=2e-2, atol=2e-2)

    print("KERNEL_OK")
</pallas_src>

<mosaic_0001>
module attributes {stable_mosaic.version = 11 : i64} {
  func.func @output_reshape_kernel(%arg0: memref<2x32xf32, #tpu.memory_space<vmem>>, %arg1: memref<32x520xbf16, #tpu.memory_space<vmem>>, %arg2: memref<1x520xf32, #tpu.memory_space<vmem>>, %arg3: memref<520x512xbf16, #tpu.memory_space<vmem>>, %arg4: memref<1x512xf32, #tpu.memory_space<vmem>>, %arg5: memref<2x512xf32, #tpu.memory_space<vmem>>) attributes {dimension_semantics = [], scalar_prefetch = 0 : i64, scratch_operands = 0 : i64, tpu.core_type = #tpu.core_type<tc>} {
    %c0 = arith.constant 0 : index
    %c0_0 = arith.constant 0 : index
    %0 = vector.load %arg0[%c0, %c0_0] : memref<2x32xf32, #tpu.memory_space<vmem>>, vector<2x32xf32>
    %1 = arith.truncf %0 : vector<2x32xf32> to vector<2x32xbf16>
    %c0_1 = arith.constant 0 : index
    %c0_2 = arith.constant 0 : index
    %2 = vector.load %arg1[%c0_1, %c0_2] : memref<32x520xbf16, #tpu.memory_space<vmem>>, vector<32x520xbf16>
    %cst = arith.constant dense<0.000000e+00> : vector<2x520xf32>
    %3 = tpu.matmul %1, %2, %cst {dimension_numbers = #tpu.dot_dimension_numbers<[1], [0], [0], [1], [0, 0, 1, 1], [], []>} : vector<2x32xbf16>, vector<32x520xbf16>, vector<2x520xf32> -> vector<2x520xf32>
    %c0_3 = arith.constant 0 : index
    %c0_4 = arith.constant 0 : index
    %4 = vector.load %arg2[%c0_3, %c0_4] : memref<1x520xf32, #tpu.memory_space<vmem>>, vector<1x520xf32>
    %5 = vector.broadcast %4 : vector<1x520xf32> to vector<2x520xf32>
    %6 = arith.addf %3, %5 : vector<2x520xf32>
    %cst_5 = arith.constant 0.000000e+00 : f32
    %7 = vector.broadcast %cst_5 : f32 to vector<2x520xf32>
    %8 = arith.maximumf %6, %7 : vector<2x520xf32>
    %9 = arith.truncf %8 : vector<2x520xf32> to vector<2x520xbf16>
    %c0_6 = arith.constant 0 : index
    %c0_7 = arith.constant 0 : index
    %10 = vector.load %arg3[%c0_6, %c0_7] : memref<520x512xbf16, #tpu.memory_space<vmem>>, vector<520x512xbf16>
    %cst_8 = arith.constant dense<0.000000e+00> : vector<2x512xf32>
    %11 = tpu.matmul %9, %10, %cst_8 {dimension_numbers = #tpu.dot_dimension_numbers<[1], [0], [0], [1], [0, 0, 1, 1], [], []>} : vector<2x520xbf16>, vector<520x512xbf16>, vector<2x512xf32> -> vector<2x512xf32>
    %c0_9 = arith.constant 0 : index
    %c0_10 = arith.constant 0 : index
    %12 = vector.load %arg4[%c0_9, %c0_10] : memref<1x512xf32, #tpu.memory_space<vmem>>, vector<1x512xf32>
    %13 = vector.broadcast %12 : vector<1x512xf32> to vector<2x512xf32>
    %14 = arith.addf %11, %13 : vector<2x512xf32>
    %cst_11 = arith.constant 0.000000e+00 : f32
    %15 = vector.broadcast %cst_11 : f32 to vector<2x512xf32>
    %16 = arith.maximumf %14, %15 : vector<2x512xf32>
    %c0_12 = arith.constant 0 : index
    %c0_13 = arith.constant 0 : index
    %17 = vector.load %arg5[%c0_12, %c0_13] : memref<2x512xf32, #tpu.memory_space<vmem>>, vector<2x512xf32>
    tpu.vector_store %arg5[%c0_12, %c0_13], %16 {strides = array<i32>} : memref<2x512xf32, #tpu.memory_space<vmem>>, vector<2x512xf32>,
    return
  }
}

</mosaic_0001>

<llo_original>
// kernel: run_output_reshape.1
$region0: #{run_output_reshape.1}
  #allocation0 [shape = 'u32[]', space=smem, size = 0x4, offset = 0x4, fixed_abs, tag = 'smem constant byte address 0x4 - core index']
  #allocation1 [shape = 'u32[72,128]{1,0:T(1,128)}', space=vmem, size = 0x9000, scoped, tag = 'internal scratch']
  %s0 = inlined_call_operand.hbm [shape: f32[2,32], index: 0, kind: input, shape index: {}]
  %s1 = inlined_call_operand.hbm [shape: bf16[32,520], index: 1, kind: input, shape index: {}]
  %s2 = inlined_call_operand.hbm [shape: f32[1,520], index: 2, kind: input, shape index: {}]
  %s3 = inlined_call_operand.hbm [shape: bf16[520,512], index: 3, kind: input, shape index: {}]
  %s4 = inlined_call_operand.hbm [shape: f32[1,512], index: 4, kind: input, shape index: {}]
  %s5 = inlined_call_operand.vmem [shape: f32[2,512], index: 5, kind: output, shape index: {}]
  %s6 = sld [smem:[#allocation0]]
  $region50: #{run_output_reshape.1} parent=0
    _
  %s8 = ssub.s32 1, %s6
  %s9 = scalar_select 0, %s8, %s6
  $region1: #{run_output_reshape.1} parent=0
    #allocation2 [shape = 'u8[1024]{0}', space=vmem, size = 0x400, scoped, tag = 'input window, operand 0, single buffered']
    #allocation3 [shape = 's32[1]{0}', space=sflag, size = 0x4, scoped, tag = 'scoped memory for run_output_reshape.1']
    #allocation4 [shape = 'u8[40960]{0}', space=vmem, size = 0xa000, scoped, tag = 'input window, operand 1, single buffered']
    #allocation5 [shape = 's32[1]{0}', space=sflag, size = 0x4, scoped, tag = 'scoped memory for run_output_reshape.1']
    #allocation6 [shape = 'u8[2560]{0}', space=vmem, size = 0xc00, scoped, tag = 'input window, operand 2, single buffered']
    #allocation7 [shape = 'u8[532480]{0}', space=vmem, size = 0x82000, scoped, tag = 'input window, operand 3, single buffered']
    #allocation8 [shape = 's32[1]{0}', space=sflag, size = 0x4, scoped, tag = 'scoped memory for run_output_reshape.1']
    #allocation9 [shape = 'u8[2048]{0}', space=vmem, size = 0x800, scoped, tag = 'input window, operand 4, single buffered']
    %10 = vsyncpa [#allocation3], 0
    %11 = vsyncpa [#allocation5], 0
    %12 = vsyncpa [#allocation8], 0
    // Predicated region
    $region2: #{run_output_reshape.1} parent=1 // pred_check
      _
    $region3: #{run_output_reshape.1} parent=1 // pred_check_branch
      %14 = sbr.rel (0) target = $region5
    $region4: #{run_output_reshape.1} parent=1 // pred_region
      %16 = vsyncadd [#allocation3], 0
      %s18 = sshll.u32 %s0, 4
      %s19 = int_to_ptr.hbm [resolvable:$true] %s18
      %s20 = sshll.u32 [#allocation2], 4
      %s21 = int_to_ptr.vmem [resolvable:$true] %s20
      %23 = dma.hbm_to_vmem [thread:$0]  %s19, 32, %s21, [#allocation3]
    $region5: #{run_output_reshape.1} parent=1 // pred_fallthru
      _
    // Predicated region
    $region6: #{run_output_reshape.1} parent=1 // pred_check
      _
    $region7: #{run_output_reshape.1} parent=1 // pred_check_branch
      %25 = sbr.rel (0) target = $region9
    $region8: #{run_output_reshape.1} parent=1 // pred_region
      %27 = vsyncadd [#allocation5], 0
      %s28 = sshll.u32 %s1, 4
      %s29 = int_to_ptr.hbm [resolvable:$true] %s28
      %s30 = sshll.u32 [#allocation4], 4
      %s31 = int_to_ptr.vmem [resolvable:$true] %s30
      %36 = dma.hbm_to_vmem [thread:$0]  %s29, 1280, %s31, [#allocation5], 320, 320, 20
    $region9: #{run_output_reshape.1} parent=1 // pred_fallthru
      _
    // Predicated region
    $region10: #{run_output_reshape.1} parent=1 // pred_check
      _
    $region11: #{run_output_reshape.1} parent=1 // pred_check_branch
      %38 = sbr.rel (0) target = $region13
    $region12: #{run_output_reshape.1} parent=1 // pred_region
      %40 = vsyncadd [#allocation5], 0
      %s42 = sshll.u32 %s2, 4
      %s43 = int_to_ptr.hbm [resolvable:$true] %s42
      %s44 = sshll.u32 [#allocation6], 4
      %s45 = int_to_ptr.vmem [resolvable:$true] %s44
      %47 = dma.hbm_to_vmem [thread:$0]  %s43, 80, %s45, [#allocation5]
    $region13: #{run_output_reshape.1} parent=1 // pred_fallthru
      _
    // Predicated region
    $region14: #{run_output_reshape.1} parent=1 // pred_check
      _
    $region15: #{run_output_reshape.1} parent=1 // pred_check_branch
      %49 = sbr.rel (0) target = $region17
    $region16: #{run_output_reshape.1} parent=1 // pred_region
      %51 = vsyncadd [#allocation8], 0
      %s52 = sshll.u32 %s3, 4
      %s53 = int_to_ptr.hbm [resolvable:$true] %s52
      %s54 = sshll.u32 [#allocation7], 4
      %s55 = int_to_ptr.vmem [resolvable:$true] %s54
      %60 = dma.hbm_to_vmem [thread:$0]  %s53, 16640, %s55, [#allocation8], 256, 256, 16
    $region17: #{run_output_reshape.1} parent=1 // pred_fallthru
      _
    // Predicated region
    $region18: #{run_output_reshape.1} parent=1 // pred_check
      _
    $region19: #{run_output_reshape.1} parent=1 // pred_check_branch
      %62 = sbr.rel (0) target = $region21
    $region20: #{run_output_reshape.1} parent=1 // pred_region
      %64 = vsyncadd [#allocation8], 0
      %s66 = sshll.u32 %s4, 4
      %s67 = int_to_ptr.hbm [resolvable:$true] %s66
      %s68 = sshll.u32 [#allocation9], 4
      %s69 = int_to_ptr.vmem [resolvable:$true] %s68
      %71 = dma.hbm_to_vmem [thread:$0]  %s67, 64, %s69, [#allocation8]
    $region21: #{run_output_reshape.1} parent=1 // pred_fallthru
      _
    // Predicated region
    $region22: #{run_output_reshape.1} parent=1 // pred_check
      _
    $region23: #{run_output_reshape.1} parent=1 // pred_check_branch
      %73 = sbr.rel (0) target = $region25
    $region24: #{run_output_reshape.1} parent=1 // pred_region
      %75 = dma.done [#allocation3], 32
    $region25: #{run_output_reshape.1} parent=1 // pred_fallthru
      _
    // Predicated region
    $region26: #{run_output_reshape.1} parent=1 // pred_check
      _
    $region27: #{run_output_reshape.1} parent=1 // pred_check_branch
      %77 = sbr.rel (0) target = $region29
    $region28: #{run_output_reshape.1} parent=1 // pred_region
      %79 = dma.done [#allocation5], 1280
    $region29: #{run_output_reshape.1} parent=1 // pred_fallthru
      _
    // Predicated region
    $region30: #{run_output_reshape.1} parent=1 // pred_check
      _
    $region31: #{run_output_reshape.1} parent=1 // pred_check_branch
      %81 = sbr.rel (0) target = $region33
    $region32: #{run_output_reshape.1} parent=1 // pred_region
      %83 = dma.done [#allocation5], 80
    $region33: #{run_output_reshape.1} parent=1 // pred_fallthru
      _
    // Predicated region
    $region34: #{run_output_reshape.1} parent=1 // pred_check
      _
    $region35: #{run_output_reshape.1} parent=1 // pred_check_branch
      %85 = sbr.rel (0) target = $region37
    $region36: #{run_output_reshape.1} parent=1 // pred_region
      %87 = dma.done [#allocation8], 16640
    $region37: #{run_output_reshape.1} parent=1 // pred_fallthru
      _
    // Predicated region
    $region38: #{run_output_reshape.1} parent=1 // pred_check
      _
    $region39: #{run_output_reshape.1} parent=1 // pred_check_branch
      %89 = sbr.rel (0) target = $region41
    $region40: #{run_output_reshape.1} parent=1 // pred_region
      %91 = dma.done [#allocation8], 64
    $region41: #{run_output_reshape.1} parent=1 // pred_fallthru
      _
    %v93 = vld [vmem:[#allocation2] sm:$0x3]
    %v94 = vpack.c.bf16 %v93, %v93
    %v95 = vld [vmem:[#allocation4] sm:$0xff]
    %v96 = vld [vmem:[#allocation4 + $0x8] sm:$0xff]
    %v97 = vld [vmem:[#allocation4 + $0x10] sm:$0xf]
    %v98 = vld [vmem:[#allocation4 + $0x14] sm:$0xff]
    %v99 = vld [vmem:[#allocation4 + $0x1c] sm:$0xff]
    %v100 = vld [vmem:[#allocation4 + $0x24] sm:$0xf]
    %v101 = vld [vmem:[#allocation4 + $0x28] sm:$0xff]
    %v102 = vld [vmem:[#allocation4 + $0x30] sm:$0xff]
    %v103 = vld [vmem:[#allocation4 + $0x38] sm:$0xf]
    %v104 = vld [vmem:[#allocation4 + $0x3c] sm:$0xff]
    %v105 = vld [vmem:[#allocation4 + $0x44] sm:$0xff]
    %v106 = vld [vmem:[#allocation4 + $0x4c] sm:$0xf]
    %v107 = vld [vmem:[#allocation6] sm:$0x1f]
    %v109 = vperm.slane %v107, 0
    %v110 = vperm.slane %v107, 1
    %v111 = vperm.slane %v107, 2
    %v112 = vperm.slane %v107, 3
    %v113 = vperm.slane %v107, 4
    %v131 = vunpack.c.l.b16 %v95
    %v132 = vunpack.c.h.b16 %v95
    %v133 = vunpack.c.l.b16 %v96
    %v134 = vunpack.c.h.b16 %v96
    %v135 = vunpack.c.l.b16 %v97
    %v136 = vunpack.c.l.b16 %v98
    %v137 = vunpack.c.h.b16 %v98
    %v138 = vunpack.c.l.b16 %v99
    %v139 = vunpack.c.h.b16 %v99
    %v140 = vunpack.c.l.b16 %v100
    %v141 = vunpack.c.l.b16 %v101
    %v142 = vunpack.c.h.b16 %v101
    %v143 = vunpack.c.l.b16 %v102
    %v144 = vunpack.c.h.b16 %v102
    %v145 = vunpack.c.l.b16 %v103
    %v146 = vunpack.c.l.b16 %v104
    %v147 = vunpack.c.h.b16 %v104
    %v148 = vunpack.c.l.b16 %v105
    %v149 = vunpack.c.h.b16 %v105
    %v150 = vunpack.c.l.b16 %v106
    %v151 = vpack.c.b16 %v136, %v131
    %v152 = vpack.c.b16 %v137, %v132
    %v153 = vpack.c.b16 %v138, %v133
    %v154 = vpack.c.b16 %v139, %v134
    %v155 = vpack.c.b16 %v140, %v135
    %v156 = vpack.c.b16 %v146, %v141
    %v157 = vpack.c.b16 %v147, %v142
    %v158 = vpack.c.b16 %v148, %v143
    %v159 = vpack.c.b16 %v149, %v144
    %v160 = vpack.c.b16 %v150, %v145
    %vm171 = vcmask 261120
    %v173 = vsel %vm171, %v94, 0
    %175 = vmatpush.bf16.msra.mxu0 0
    %176 = vmatpush.bf16.msra.mxu0 0
    %177 = vmatpush.bf16.msra.mxu0 0
    %178 = vmatpush.bf16.msra.mxu0 0
    %179 = vmatpush.bf16.msra.mxu0 0
    %180 = vmatpush.bf16.msra.mxu0 0
    %181 = vmatpush.bf16.msra.mxu0 %v156
    %182 = vmatpush.bf16.msra.mxu0 %v151
    %183 = vmatmul.bf16.gmra.mxu0 %v173
    %v184 = vpop.f32.mrf.mxu0
    %v185 = vadd.f32 %v109, %v184
    %v186 = vpop.f32.mrf.mxu0
    %187 = vdwg.mxu0
    %188 = vmatpush.bf16.msra.mxu0 0
    %189 = vmatpush.bf16.msra.mxu0 0
    %190 = vmatpush.bf16.msra.mxu0 0
    %191 = vmatpush.bf16.msra.mxu0 0
    %192 = vmatpush.bf16.msra.mxu0 0
    %193 = vmatpush.bf16.msra.mxu0 0
    %194 = vmatpush.bf16.msra.mxu0 %v157
    %195 = vmatpush.bf16.msra.mxu0 %v152
    %196 = vmatmul.bf16.gmra.mxu0 %v173
    %v197 = vpop.f32.mrf.mxu0
    %v198 = vadd.f32 %v110, %v197
    %v199 = vpop.f32.mrf.mxu0
    %200 = vdwg.mxu0
    %201 = vmatpush.bf16.msra.mxu0 0
    %202 = vmatpush.bf16.msra.mxu0 0
    %203 = vmatpush.bf16.msra.mxu0 0
    %204 = vmatpush.bf16.msra.mxu0 0
    %205 = vmatpush.bf16.msra.mxu0 0
    %206 = vmatpush.bf16.msra.mxu0 0
    %207 = vmatpush.bf16.msra.mxu0 %v158
    %208 = vmatpush.bf16.msra.mxu0 %v153
    %209 = vmatmul.bf16.gmra.mxu0 %v173
    %v210 = vpop.f32.mrf.mxu0
    %v211 = vadd.f32 %v111, %v210
    %v212 = vpop.f32.mrf.mxu0
    %213 = vdwg.mxu0
    %214 = vmatpush.bf16.msra.mxu0 0
    %215 = vmatpush.bf16.msra.mxu0 0
    %216 = vmatpush.bf16.msra.mxu0 0
    %217 = vmatpush.bf16.msra.mxu0 0
    %218 = vmatpush.bf16.msra.mxu0 0
    %219 = vmatpush.bf16.msra.mxu0 0
    %220 = vmatpush.bf16.msra.mxu0 %v159
    %221 = vmatpush.bf16.msra.mxu0 %v154
    %222 = vmatmul.bf16.gmra.mxu0 %v173
    %v223 = vpop.f32.mrf.mxu0
    %v224 = vadd.f32 %v112, %v223
    %v225 = vpop.f32.mrf.mxu0
    %226 = vdwg.mxu0
    %227 = vmatpush.bf16.msra.mxu0 0
    %228 = vmatpush.bf16.msra.mxu0 0
    %229 = vmatpush.bf16.msra.mxu0 0
    %230 = vmatpush.bf16.msra.mxu0 0
    %231 = vmatpush.bf16.msra.mxu0 0
    %232 = vmatpush.bf16.msra.mxu0 0
    %233 = vmatpush.bf16.msra.mxu0 %v160
    %234 = vmatpush.bf16.msra.mxu0 %v155
    %235 = vmatmul.bf16.gmra.mxu0 %v173
    %v236 = vpop.f32.mrf.mxu0
    %v237 = vadd.f32 %v113, %v236
    %v238 = vpop.f32.mrf.mxu0
    %239 = vdwg.mxu0
    %v240 = vmax.f32 %v185, 0.0
    %v241 = vmax.f32 %v198, 0.0
    %v242 = vmax.f32 %v211, 0.0
    %v243 = vmax.f32 %v224, 0.0
    %v244 = vmax.f32 %v237, 0.0
    %v245 = vpack.c.bf16 %v240, %v240
    %v246 = vpack.c.bf16 %v241, %v241
    %v247 = vpack.c.bf16 %v242, %v242
    %v248 = vpack.c.bf16 %v243, %v243
    %v249 = vpack.c.bf16 %v244, %v244
    %v250 = vld [vmem:[#allocation7] sm:$0xff]
    %v251 = vld [vmem:[#allocation7 + $0x8] sm:$0xff]
    %v252 = vld [vmem:[#allocation7 + $0x10] sm:$0xff]
    %v253 = vld [vmem:[#allocation7 + $0x18] sm:$0xff]
    %v254 = vld [vmem:[#allocation7 + $0x20] sm:$0xff]
    %v255 = vld [vmem:[#allocation7 + $0x28] sm:$0xff]
    %v256 = vld [vmem:[#allocation7 + $0x30] sm:$0xff]
    %v257 = vld [vmem:[#allocation7 + $0x38] sm:$0xff]
    %v258 = vld [vmem:[#allocation7 + $0x40] sm:$0xff]
    %v259 = vld [vmem:[#allocation7 + $0x48] sm:$0xff]
    %v260 = vld [vmem:[#allocation7 + $0x50] sm:$0xff]
    %v261 = vld [vmem:[#allocation7 + $0x58] sm:$0xff]
    %v262 = vld [vmem:[#allocation7 + $0x60] sm:$0xff]
    %v263 = vld [vmem:[#allocation7 + $0x68] sm:$0xff]
    %v264 = vld [vmem:[#allocation7 + $0x70] sm:$0xff]
    %v265 = vld [vmem:[#allocation7 + $0x78] sm:$0xff]
    %v266 = vld [vmem:[#allocation7 + $0x80] sm:$0xff]
    %v267 = vld [vmem:[#allocation7 + $0x88] sm:$0xff]
    %v268 = vld [vmem:[#allocation7 + $0x90] sm:$0xff]
    %v269 = vld [vmem:[#allocation7 + $0x98] sm:$0xff]
    %v270 = vld [vmem:[#allocation7 + $0xa0] sm:$0xff]
    %v271 = vld [vmem:[#allocation7 + $0xa8] sm:$0xff]
    %v272 = vld [vmem:[#allocation7 + $0xb0] sm:$0xff]
    %v273 = vld [vmem:[#allocation7 + $0xb8] sm:$0xff]
    %v274 = vld [vmem:[#allocation7 + $0xc0] sm:$0xff]
    %v275 = vld [vmem:[#allocation7 + $0xc8] sm:$0xff]
    %v276 = vld [vmem:[#allocation7 + $0xd0] sm:$0xff]
    %v277 = vld [vmem:[#allocation7 + $0xd8] sm:$0xff]
    %v278 = vld [vmem:[#allocation7 + $0xe0] sm:$0xff]
    %v279 = vld [vmem:[#allocation7 + $0xe8] sm:$0xff]
    %v280 = vld [vmem:[#allocation7 + $0xf0] sm:$0xff]
    %v281 = vld [vmem:[#allocation7 + $0xf8] sm:$0xff]
    %v282 = vld [vmem:[#allocation7 + $0x100] sm:$0xff]
    %v283 = vld [vmem:[#allocation7 + $0x108] sm:$0xff]
    %v284 = vld [vmem:[#allocation7 + $0x110] sm:$0xff]
    %v285 = vld [vmem:[#allocation7 + $0x118] sm:$0xff]
    %v286 = vld [vmem:[#allocation7 + $0x120] sm:$0xff]
    %v287 = vld [vmem:[#allocation7 + $0x128] sm:$0xff]
    %v288 = vld [vmem:[#allocation7 + $0x130] sm:$0xff]
    %v289 = vld [vmem:[#allocation7 + $0x138] sm:$0xff]
    %v290 = vld [vmem:[#allocation7 + $0x140] sm:$0xff]
    %v291 = vld [vmem:[#allocation7 + $0x148] sm:$0xff]
    %v292 = vld [vmem:[#allocation7 + $0x150] sm:$0xff]
    %v293 = vld [vmem:[#allocation7 + $0x158] sm:$0xff]
    %v294 = vld [vmem:[#allocation7 + $0x160] sm:$0xff]
    %v295 = vld [vmem:[#allocation7 + $0x168] sm:$0xff]
    %v296 = vld [vmem:[#allocation7 + $0x170] sm:$0xff]
    %v297 = vld [vmem:[#allocation7 + $0x178] sm:$0xff]
    %v298 = vld [vmem:[#allocation7 + $0x180] sm:$0xff]
    %v299 = vld [vmem:[#allocation7 + $0x188] sm:$0xff]
    %v300 = vld [vmem:[#allocation7 + $0x190] sm:$0xff]
    %v301 = vld [vmem:[#allocation7 + $0x198] sm:$0xff]
    %v302 = vld [vmem:[#allocation7 + $0x1a0] sm:$0xff]
    %v303 = vld [vmem:[#allocation7 + $0x1a8] sm:$0xff]
    %v304 = vld [vmem:[#allocation7 + $0x1b0] sm:$0xff]
    %v305 = vld [vmem:[#allocation7 + $0x1b8] sm:$0xff]
    %v306 = vld [vmem:[#allocation7 + $0x1c0] sm:$0xff]
    %v307 = vld [vmem:[#allocation7 + $0x1c8] sm:$0xff]
    %v308 = vld [vmem:[#allocation7 + $0x1d0] sm:$0xff]
    %v309 = vld [vmem:[#allocation7 + $0x1d8] sm:$0xff]
    %v310 = vld [vmem:[#allocation7 + $0x1e0] sm:$0xff]
    %v311 = vld [vmem:[#allocation7 + $0x1e8] sm:$0xff]
    %v312 = vld [vmem:[#allocation7 + $0x1f0] sm:$0xff]
    %v313 = vld [vmem:[#allocation7 + $0x1f8] sm:$0xff]
    %v314 = vld [vmem:[#allocation7 + $0x200] sm:$0xff]
    %v315 = vld [vmem:[#allocation7 + $0x208] sm:$0xff]
    %v316 = vld [vmem:[#allocation7 + $0x210] sm:$0xff]
    %v317 = vld [vmem:[#allocation7 + $0x218] sm:$0xff]
    %v318 = vld [vmem:[#allocation7 + $0x220] sm:$0xff]
    %v319 = vld [vmem:[#allocation7 + $0x228] sm:$0xff]
    %v320 = vld [vmem:[#allocation7 + $0x230] sm:$0xff]
    %v321 = vld [vmem:[#allocation7 + $0x238] sm:$0xff]
    %v322 = vld [vmem:[#allocation7 + $0x240] sm:$0xff]
    %v323 = vld [vmem:[#allocation7 + $0x248] sm:$0xff]
    %v324 = vld [vmem:[#allocation7 + $0x250] sm:$0xff]
    %v325 = vld [vmem:[#allocation7 + $0x258] sm:$0xff]
    %v326 = vld [vmem:[#allocation7 + $0x260] sm:$0xff]
    %v327 = vld [vmem:[#allocation7 + $0x268] sm:$0xff]
    %v328 = vld [vmem:[#allocation7 + $0x270] sm:$0xff]
    %v329 = vld [vmem:[#allocation7 + $0x278] sm:$0xff]
    %v330 = vld [vmem:[#allocation7 + $0x280] sm:$0xff]
    %v331 = vld [vmem:[#allocation7 + $0x288] sm:$0xff]
    %v332 = vld [vmem:[#allocation7 + $0x290] sm:$0xff]
    %v333 = vld [vmem:[#allocation7 + $0x298] sm:$0xff]
    %v334 = vld [vmem:[#allocation7 + $0x2a0] sm:$0xff]
    %v335 = vld [vmem:[#allocation7 + $0x2a8] sm:$0xff]
    %v336 = vld [vmem:[#allocation7 + $0x2b0] sm:$0xff]
    %v337 = vld [vmem:[#allocation7 + $0x2b8] sm:$0xff]
    %v338 = vld [vmem:[#allocation7 + $0x2c0] sm:$0xff]
    %v339 = vld [vmem:[#allocation7 + $0x2c8] sm:$0xff]
    %v340 = vld [vmem:[#allocation7 + $0x2d0] sm:$0xff]
    %v341 = vld [vmem:[#allocation7 + $0x2d8] sm:$0xff]
    %v342 = vld [vmem:[#allocation7 + $0x2e0] sm:$0xff]
    %v343 = vld [vmem:[#allocation7 + $0x2e8] sm:$0xff]
    %v344 = vld [vmem:[#allocation7 + $0x2f0] sm:$0xff]
    %v345 = vld [vmem:[#allocation7 + $0x2f8] sm:$0xff]
    %v346 = vld [vmem:[#allocation7 + $0x300] sm:$0xff]
    %v347 = vld [vmem:[#allocation7 + $0x308] sm:$0xff]
    %v348 = vld [vmem:[#allocation7 + $0x310] sm:$0xff]
    %v349 = vld [vmem:[#allocation7 + $0x318] sm:$0xff]
    %v350 = vld [vmem:[#allocation7 + $0x320] sm:$0xff]
    %v351 = vld [vmem:[#allocation7 + $0x328] sm:$0xff]
    %v352 = vld [vmem:[#allocation7 + $0x330] sm:$0xff]
    %v353 = vld [vmem:[#allocation7 + $0x338] sm:$0xff]
    %v354 = vld [vmem:[#allocation7 + $0x340] sm:$0xff]
    %v355 = vld [vmem:[#allocation7 + $0x348] sm:$0xff]
    %v356 = vld [vmem:[#allocation7 + $0x350] sm:$0xff]
    %v357 = vld [vmem:[#allocation7 + $0x358] sm:$0xff]
    %v358 = vld [vmem:[#allocation7 + $0x360] sm:$0xff]
    %v359 = vld [vmem:[#allocation7 + $0x368] sm:$0xff]
    %v360 = vld [vmem:[#allocation7 + $0x370] sm:$0xff]
    %v361 = vld [vmem:[#allocation7 + $0x378] sm:$0xff]
    %v362 = vld [vmem:[#allocation7 + $0x380] sm:$0xff]
    %v363 = vld [vmem:[#allocation7 + $0x388] sm:$0xff]
    %v364 = vld [vmem:[#allocation7 + $0x390] sm:$0xff]
    %v365 = vld [vmem:[#allocation7 + $0x398] sm:$0xff]
    %v366 = vld [vmem:[#allocation7 + $0x3a0] sm:$0xff]
    %v367 = vld [vmem:[#allocation7 + $0x3a8] sm:$0xff]
    %v368 = vld [vmem:[#allocation7 + $0x3b0] sm:$0xff]
    %v369 = vld [vmem:[#allocation7 + $0x3b8] sm:$0xff]
    %v370 = vld [vmem:[#allocation7 + $0x3c0] sm:$0xff]
    %v371 = vld [vmem:[#allocation7 + $0x3c8] sm:$0xff]
    %v372 = vld [vmem:[#allocation7 + $0x3d0] sm:$0xff]
    %v373 = vld [vmem:[#allocation7 + $0x3d8] sm:$0xff]
    %v374 = vld [vmem:[#allocation7 + $0x3e0] sm:$0xff]
    %v375 = vld [vmem:[#allocation7 + $0x3e8] sm:$0xff]
    %v376 = vld [vmem:[#allocation7 + $0x3f0] sm:$0xff]
    %v377 = vld [vmem:[#allocation7 + $0x3f8] sm:$0xff]
    %v378 = vld [vmem:[#allocation7 + $0x400] sm:$0xff]
    %v379 = vld [vmem:[#allocation7 + $0x408] sm:$0xff]
    %v380 = vld [vmem:[#allocation9] sm:$0xf]
    %v382 = vperm.slane %v380, 0
    %v383 = vperm.slane %v380, 1
    %v384 = vperm.slane %v380, 2
    %v385 = vperm.slane %v380, 3
    %v520 = vunpack.c.l.b16 %v250
    %v521 = vunpack.c.h.b16 %v250
    %v522 = vunpack.c.l.b16 %v251
    %v523 = vunpack.c.h.b16 %v251
    %v524 = vunpack.c.l.b16 %v252
    %v525 = vunpack.c.h.b16 %v252
    %v526 = vunpack.c.l.b16 %v253
    %v527 = vunpack.c.h.b16 %v253
    %v528 = vunpack.c.l.b16 %v254
    %v529 = vunpack.c.h.b16 %v254
    %v530 = vunpack.c.l.b16 %v255
    %v531 = vunpack.c.h.b16 %v255
    %v532 = vunpack.c.l.b16 %v256
    %v533 = vunpack.c.h.b16 %v256
    %v534 = vunpack.c.l.b16 %v257
    %v535 = vunpack.c.h.b16 %v257
    %v536 = vunpack.c.l.b16 %v258
    %v537 = vunpack.c.h.b16 %v258
    %v538 = vunpack.c.l.b16 %v259
    %v539 = vunpack.c.h.b16 %v259
    %v540 = vunpack.c.l.b16 %v260
    %v541 = vunpack.c.h.b16 %v260
    %v542 = vunpack.c.l.b16 %v261
    %v543 = vunpack.c.h.b16 %v261
    %v544 = vunpack.c.l.b16 %v262
    %v545 = vunpack.c.h.b16 %v262
    %v546 = vunpack.c.l.b16 %v263
    %v547 = vunpack.c.h.b16 %v263
    %v548 = vunpack.c.l.b16 %v264
    %v549 = vunpack.c.h.b16 %v264
    %v550 = vunpack.c.l.b16 %v265
    %v551 = vunpack.c.h.b16 %v265
    %v552 = vunpack.c.l.b16 %v266
    %v553 = vunpack.c.h.b16 %v266
    %v554 = vunpack.c.l.b16 %v267
    %v555 = vunpack.c.h.b16 %v267
    %v556 = vunpack.c.l.b16 %v268
    %v557 = vunpack.c.h.b16 %v268
    %v558 = vunpack.c.l.b16 %v269
    %v559 = vunpack.c.h.b16 %v269
    %v560 = vunpack.c.l.b16 %v270
    %v561 = vunpack.c.h.b16 %v270
    %v562 = vunpack.c.l.b16 %v271
    %v563 = vunpack.c.h.b16 %v271
    %v564 = vunpack.c.l.b16 %v272
    %v565 = vunpack.c.h.b16 %v272
    %v566 = vunpack.c.l.b16 %v273
    %v567 = vunpack.c.h.b16 %v273
    %v568 = vunpack.c.l.b16 %v274
    %v569 = vunpack.c.h.b16 %v274
    %v570 = vunpack.c.l.b16 %v275
    %v571 = vunpack.c.h.b16 %v275
    %v572 = vunpack.c.l.b16 %v276
    %v573 = vunpack.c.h.b16 %v276
    %v574 = vunpack.c.l.b16 %v277
    %v575 = vunpack.c.h.b16 %v277
    %v576 = vunpack.c.l.b16 %v278
    %v577 = vunpack.c.h.b16 %v278
    %v578 = vunpack.c.l.b16 %v279
    %v579 = vunpack.c.h.b16 %v279
    %v580 = vunpack.c.l.b16 %v280
    %v581 = vunpack.c.h.b16 %v280
    %v582 = vunpack.c.l.b16 %v281
    %v583 = vunpack.c.h.b16 %v281
    %v584 = vunpack.c.l.b16 %v282
    %v585 = vunpack.c.h.b16 %v282
    %v586 = vunpack.c.l.b16 %v283
    %v587 = vunpack.c.h.b16 %v283
    %v588 = vunpack.c.l.b16 %v284
    %v589 = vunpack.c.h.b16 %v284
    %v590 = vunpack.c.l.b16 %v285
    %v591 = vunpack.c.h.b16 %v285
    %v592 = vunpack.c.l.b16 %v286
    %v593 = vunpack.c.h.b16 %v286
    %v594 = vunpack.c.l.b16 %v287
    %v595 = vunpack.c.h.b16 %v287
    %v596 = vunpack.c.l.b16 %v288
    %v597 = vunpack.c.h.b16 %v288
    %v598 = vunpack.c.l.b16 %v289
    %v599 = vunpack.c.h.b16 %v289
    %v600 = vunpack.c.l.b16 %v290
    %v601 = vunpack.c.h.b16 %v290
    %v602 = vunpack.c.l.b16 %v291
    %v603 = vunpack.c.h.b16 %v291
    %v604 = vunpack.c.l.b16 %v292
    %v605 = vunpack.c.h.b16 %v292
    %v606 = vunpack.c.l.b16 %v293
    %v607 = vunpack.c.h.b16 %v293
    %v608 = vunpack.c.l.b16 %v294
    %v609 = vunpack.c.h.b16 %v294
    %v610 = vunpack.c.l.b16 %v295
    %v611 = vunpack.c.h.b16 %v295
    %v612 = vunpack.c.l.b16 %v296
    %v613 = vunpack.c.h.b16 %v296
    %v614 = vunpack.c.l.b16 %v297
    %v615 = vunpack.c.h.b16 %v297
    %v616 = vunpack.c.l.b16 %v298
    %v617 = vunpack.c.h.b16 %v298
    %v618 = vunpack.c.l.b16 %v299
    %v619 = vunpack.c.h.b16 %v299
    %v620 = vunpack.c.l.b16 %v300
    %v621 = vunpack.c.h.b16 %v300
    %v622 = vunpack.c.l.b16 %v301
    %v623 = vunpack.c.h.b16 %v301
    %v624 = vunpack.c.l.b16 %v302
    %v625 = vunpack.c.h.b16 %v302
    %v626 = vunpack.c.l.b16 %v303
    %v627 = vunpack.c.h.b16 %v303
    %v628 = vunpack.c.l.b16 %v304
    %v629 = vunpack.c.h.b16 %v304
    %v630 = vunpack.c.l.b16 %v305
    %v631 = vunpack.c.h.b16 %v305
    %v632 = vunpack.c.l.b16 %v306
    %v633 = vunpack.c.h.b16 %v306
    %v634 = vunpack.c.l.b16 %v307
    %v635 = vunpack.c.h.b16 %v307
    %v636 = vunpack.c.l.b16 %v308
    %v637 = vunpack.c.h.b16 %v308
    %v638 = vunpack.c.l.b16 %v309
    %v639 = vunpack.c.h.b16 %v309
    %v640 = vunpack.c.l.b16 %v310
    %v641 = vunpack.c.h.b16 %v310
    %v642 = vunpack.c.l.b16 %v311
    %v643 = vunpack.c.h.b16 %v311
    %v644 = vunpack.c.l.b16 %v312
    %v645 = vunpack.c.h.b16 %v312
    %v646 = vunpack.c.l.b16 %v313
    %v647 = vunpack.c.h.b16 %v313
    %v648 = vunpack.c.l.b16 %v314
    %v649 = vunpack.c.h.b16 %v314
    %v650 = vunpack.c.l.b16 %v315
    %v651 = vunpack.c.h.b16 %v315
    %v652 = vunpack.c.l.b16 %v316
    %v653 = vunpack.c.h.b16 %v316
    %v654 = vunpack.c.l.b16 %v317
    %v655 = vunpack.c.h.b16 %v317
    %v656 = vunpack.c.l.b16 %v318
    %v657 = vunpack.c.h.b16 %v318
    %v658 = vunpack.c.l.b16 %v319
    %v659 = vunpack.c.h.b16 %v319
    %v660 = vunpack.c.l.b16 %v320
    %v661 = vunpack.c.h.b16 %v320
    %v662 = vunpack.c.l.b16 %v321
    %v663 = vunpack.c.h.b16 %v321
    %v664 = vunpack.c.l.b16 %v322
    %v665 = vunpack.c.h.b16 %v322
    %v666 = vunpack.c.l.b16 %v323
    %v667 = vunpack.c.h.b16 %v323
    %v668 = vunpack.c.l.b16 %v324
    %v669 = vunpack.c.h.b16 %v324
    %v670 = vunpack.c.l.b16 %v325
    %v671 = vunpack.c.h.b16 %v325
    %v672 = vunpack.c.l.b16 %v326
    %v673 = vunpack.c.h.b16 %v326
    %v674 = vunpack.c.l.b16 %v327
    %v675 = vunpack.c.h.b16 %v327
    %v676 = vunpack.c.l.b16 %v328
    %v677 = vunpack.c.h.b16 %v328
    %v678 = vunpack.c.l.b16 %v329
    %v679 = vunpack.c.h.b16 %v329
    %v680 = vunpack.c.l.b16 %v330
    %v681 = vunpack.c.h.b16 %v330
    %v682 = vunpack.c.l.b16 %v331
    %v683 = vunpack.c.h.b16 %v331
    %v684 = vunpack.c.l.b16 %v332
    %v685 = vunpack.c.h.b16 %v332
    %v686 = vunpack.c.l.b16 %v333
    %v687 = vunpack.c.h.b16 %v333
    %v688 = vunpack.c.l.b16 %v334
    %v689 = vunpack.c.h.b16 %v334
    %v690 = vunpack.c.l.b16 %v335
    %v691 = vunpack.c.h.b16 %v335
    %v692 = vunpack.c.l.b16 %v336
    %v693 = vunpack.c.h.b16 %v336
    %v694 = vunpack.c.l.b16 %v337
    %v695 = vunpack.c.h.b16 %v337
    %v696 = vunpack.c.l.b16 %v338
    %v697 = vunpack.c.h.b16 %v338
    %v698 = vunpack.c.l.b16 %v339
    %v699 = vunpack.c.h.b16 %v339
    %v700 = vunpack.c.l.b16 %v340
    %v701 = vunpack.c.h.b16 %v340
    %v702 = vunpack.c.l.b16 %v341
    %v703 = vunpack.c.h.b16 %v341
    %v704 = vunpack.c.l.b16 %v342
    %v705 = vunpack.c.h.b16 %v342
    %v706 = vunpack.c.l.b16 %v343
    %v707 = vunpack.c.h.b16 %v343
    %v708 = vunpack.c.l.b16 %v344
    %v709 = vunpack.c.h.b16 %v344
    %v710 = vunpack.c.l.b16 %v345
    %v711 = vunpack.c.h.b16 %v345
    %v712 = vunpack.c.l.b16 %v346
    %v713 = vunpack.c.h.b16 %v346
    %v714 = vunpack.c.l.b16 %v347
    %v715 = vunpack.c.h.b16 %v347
    %v716 = vunpack.c.l.b16 %v348
    %v717 = vunpack.c.h.b16 %v348
    %v718 = vunpack.c.l.b16 %v349
    %v719 = vunpack.c.h.b16 %v349
    %v720 = vunpack.c.l.b16 %v350
    %v721 = vunpack.c.h.b16 %v350
    %v722 = vunpack.c.l.b16 %v351
    %v723 = vunpack.c.h.b16 %v351
    %v724 = vunpack.c.l.b16 %v352
    %v725 = vunpack.c.h.b16 %v352
    %v726 = vunpack.c.l.b16 %v353
    %v727 = vunpack.c.h.b16 %v353
    %v728 = vunpack.c.l.b16 %v354
    %v729 = vunpack.c.h.b16 %v354
    %v730 = vunpack.c.l.b16 %v355
    %v731 = vunpack.c.h.b16 %v355
    %v732 = vunpack.c.l.b16 %v356
    %v733 = vunpack.c.h.b16 %v356
    %v734 = vunpack.c.l.b16 %v357
    %v735 = vunpack.c.h.b16 %v357
    %v736 = vunpack.c.l.b16 %v358
    %v737 = vunpack.c.h.b16 %v358
    %v738 = vunpack.c.l.b16 %v359
    %v739 = vunpack.c.h.b16 %v359
    %v740 = vunpack.c.l.b16 %v360
    %v741 = vunpack.c.h.b16 %v360
    %v742 = vunpack.c.l.b16 %v361
    %v743 = vunpack.c.h.b16 %v361
    %v744 = vunpack.c.l.b16 %v362
    %v745 = vunpack.c.h.b16 %v362
    %v746 = vunpack.c.l.b16 %v363
    %v747 = vunpack.c.h.b16 %v363
    %v748 = vunpack.c.l.b16 %v364
    %v749 = vunpack.c.h.b16 %v364
    %v750 = vunpack.c.l.b16 %v365
    %v751 = vunpack.c.h.b16 %v365
    %v752 = vunpack.c.l.b16 %v366
    %v753 = vunpack.c.h.b16 %v366
    %v754 = vunpack.c.l.b16 %v367
    %v755 = vunpack.c.h.b16 %v367
    %v756 = vunpack.c.l.b16 %v368
    %v757 = vunpack.c.h.b16 %v368
    %v758 = vunpack.c.l.b16 %v369
    %v759 = vunpack.c.h.b16 %v369
    %v760 = vunpack.c.l.b16 %v370
    %v761 = vunpack.c.h.b16 %v370
    %v762 = vunpack.c.l.b16 %v371
    %v763 = vunpack.c.h.b16 %v371
    %v764 = vunpack.c.l.b16 %v372
    %v765 = vunpack.c.h.b16 %v372
    %v766 = vunpack.c.l.b16 %v373
    %v767 = vunpack.c.h.b16 %v373
    %v768 = vunpack.c.l.b16 %v374
    %v769 = vunpack.c.h.b16 %v374
    %v770 = vunpack.c.l.b16 %v375
    %v771 = vunpack.c.h.b16 %v375
    %v772 = vunpack.c.l.b16 %v376
    %v773 = vunpack.c.h.b16 %v376
    %v774 = vunpack.c.l.b16 %v377
    %v775 = vunpack.c.h.b16 %v377
    %v776 = vunpack.c.l.b16 %v378
    %v777 = vunpack.c.h.b16 %v378
    %v778 = vunpack.c.l.b16 %v379
    %v779 = vunpack.c.h.b16 %v379
    %v780 = vpack.c.b16 %v524, %v520
    %v781 = vpack.c.b16 %v525, %v521
    %v782 = vpack.c.b16 %v526, %v522
    %v783 = vpack.c.b16 %v527, %v523
    %v784 = vpack.c.b16 %v532, %v528
    %v785 = vpack.c.b16 %v533, %v529
    %v786 = vpack.c.b16 %v534, %v530
    %v787 = vpack.c.b16 %v535, %v531
    %v788 = vpack.c.b16 %v540, %v536
    %v789 = vpack.c.b16 %v541, %v537
    %v790 = vpack.c.b16 %v542, %v538
    %v791 = vpack.c.b16 %v543, %v539
    %v792 = vpack.c.b16 %v548, %v544
    %v793 = vpack.c.b16 %v549, %v545
    %v794 = vpack.c.b16 %v550, %v546
    %v795 = vpack.c.b16 %v551, %v547
    %v796 = vpack.c.b16 %v556, %v552
    %v797 = vpack.c.b16 %v557, %v553
    %v798 = vpack.c.b16 %v558, %v554
    %v799 = vpack.c.b16 %v559, %v555
    %v800 = vpack.c.b16 %v564, %v560
    %v801 = vpack.c.b16 %v565, %v561
    %v802 = vpack.c.b16 %v566, %v562
    %v803 = vpack.c.b16 %v567, %v563
    %v804 = vpack.c.b16 %v572, %v568
    %v805 = vpack.c.b16 %v573, %v569
    %v806 = vpack.c.b16 %v574, %v570
    %v807 = vpack.c.b16 %v575, %v571
    %v808 = vpack.c.b16 %v580, %v576
    %v809 = vpack.c.b16 %v581, %v577
    %v810 = vpack.c.b16 %v582, %v578
    %v811 = vpack.c.b16 %v583, %v579
    %v812 = vpack.c.b16 %v588, %v584
    %v813 = vpack.c.b16 %v589, %v585
    %v814 = vpack.c.b16 %v590, %v586
    %v815 = vpack.c.b16 %v591, %v587
    %v816 = vpack.c.b16 %v596, %v592
    %v817 = vpack.c.b16 %v597, %v593
    %v818 = vpack.c.b16 %v598, %v594
    %v819 = vpack.c.b16 %v599, %v595
    %v820 = vpack.c.b16 %v604, %v600
    %v821 = vpack.c.b16 %v605, %v601
    %v822 = vpack.c.b16 %v606, %v602
    %v823 = vpack.c.b16 %v607, %v603
    %v824 = vpack.c.b16 %v612, %v608
    %v825 = vpack.c.b16 %v613, %v609
    %v826 = vpack.c.b16 %v614, %v610
    %v827 = vpack.c.b16 %v615, %v611
    %v828 = vpack.c.b16 %v620, %v616
    %v829 = vpack.c.b16 %v621, %v617
    %v830 = vpack.c.b16 %v622, %v618
    %v831 = vpack.c.b16 %v623, %v619
    %v832 = vpack.c.b16 %v628, %v624
    %v833 = vpack.c.b16 %v629, %v625
    %v834 = vpack.c.b16 %v630, %v626
    %v835 = vpack.c.b16 %v631, %v627
    %v836 = vpack.c.b16 %v636, %v632
    %v837 = vpack.c.b16 %v637, %v633
    %v838 = vpack.c.b16 %v638, %v634
    %v839 = vpack.c.b16 %v639, %v635
    %v840 = vpack.c.b16 %v644, %v640
    %v841 = vpack.c.b16 %v645, %v641
    %v842 = vpack.c.b16 %v646, %v642
    %v843 = vpack.c.b16 %v647, %v643
    %v844 = vpack.c.b16 %v652, %v648
    %v845 = vpack.c.b16 %v653, %v649
    %v846 = vpack.c.b16 %v654, %v650
    %v847 = vpack.c.b16 %v655, %v651
    %v848 = vpack.c.b16 %v660, %v656
    %v849 = vpack.c.b16 %v661, %v657
    %v850 = vpack.c.b16 %v662, %v658
    %v851 = vpack.c.b16 %v663, %v659
    %v852 = vpack.c.b16 %v668, %v664
    %v853 = vpack.c.b16 %v669, %v665
    %v854 = vpack.c.b16 %v670, %v666
    %v855 = vpack.c.b16 %v671, %v667
    %v856 = vpack.c.b16 %v676, %v672
    %v857 = vpack.c.b16 %v677, %v673
    %v858 = vpack.c.b16 %v678, %v674
    %v859 = vpack.c.b16 %v679, %v675
    %v860 = vpack.c.b16 %v684, %v680
    %v861 = vpack.c.b16 %v685, %v681
    %v862 = vpack.c.b16 %v686, %v682
    %v863 = vpack.c.b16 %v687, %v683
    %v864 = vpack.c.b16 %v692, %v688
    %v865 = vpack.c.b16 %v693, %v689
    %v866 = vpack.c.b16 %v694, %v690
    %v867 = vpack.c.b16 %v695, %v691
    %v868 = vpack.c.b16 %v700, %v696
    %v869 = vpack.c.b16 %v701, %v697
    %v870 = vpack.c.b16 %v702, %v698
    %v871 = vpack.c.b16 %v703, %v699
    %v872 = vpack.c.b16 %v708, %v704
    %v873 = vpack.c.b16 %v709, %v705
    %v874 = vpack.c.b16 %v710, %v706
    %v875 = vpack.c.b16 %v711, %v707
    %v876 = vpack.c.b16 %v716, %v712
    %v877 = vpack.c.b16 %v717, %v713
    %v878 = vpack.c.b16 %v718, %v714
    %v879 = vpack.c.b16 %v719, %v715
    %v880 = vpack.c.b16 %v724, %v720
    %v881 = vpack.c.b16 %v725, %v721
    %v882 = vpack.c.b16 %v726, %v722
    %v883 = vpack.c.b16 %v727, %v723
    %v884 = vpack.c.b16 %v732, %v728
    %v885 = vpack.c.b16 %v733, %v729
    %v886 = vpack.c.b16 %v734, %v730
    %v887 = vpack.c.b16 %v735, %v731
    %v888 = vpack.c.b16 %v740, %v736
    %v889 = vpack.c.b16 %v741, %v737
    %v890 = vpack.c.b16 %v742, %v738
    %v891 = vpack.c.b16 %v743, %v739
    %v892 = vpack.c.b16 %v748, %v744
    %v893 = vpack.c.b16 %v749, %v745
    %v894 = vpack.c.b16 %v750, %v746
    %v895 = vpack.c.b16 %v751, %v747
    %v896 = vpack.c.b16 %v756, %v752
    %v897 = vpack.c.b16 %v757, %v753
    %v898 = vpack.c.b16 %v758, %v754
    %v899 = vpack.c.b16 %v759, %v755
    %v900 = vpack.c.b16 %v764, %v760
    %v901 = vpack.c.b16 %v765, %v761
    %v902 = vpack.c.b16 %v766, %v762
    %v903 = vpack.c.b16 %v767, %v763
    %v904 = vpack.c.b16 %v772, %v768
    %v905 = vpack.c.b16 %v773, %v769
    %v906 = vpack.c.b16 %v774, %v770
    %v907 = vpack.c.b16 %v775, %v771
    %v908 = vpack.c.b16 %v776, %v776
    %v909 = vpack.c.b16 %v777, %v777
    %v910 = vpack.c.b16 %v778, %v778
    %v911 = vpack.c.b16 %v779, %v779
    %vm1040 = vcmask 64512
    %v1042 = vsel %vm1040, %v249, 0
    %vm1044 = vcmask 1043456
    %v1046 = vsel %vm1044, %v908, 0
    %v1049 = vsel %vm1044, %v909, 0
    %v1052 = vsel %vm1044, %v910, 0
    %v1055 = vsel %vm1044, %v911, 0
    %1057 = vmatpush.bf16.msra.mxu0 %v808
    %1058 = vmatpush.bf16.msra.mxu0 %v804
    %1059 = vmatpush.bf16.msra.mxu0 %v800
    %1060 = vmatpush.bf16.msra.mxu0 %v796
    %1061 = vmatpush.bf16.msra.mxu0 %v792
    %1062 = vmatpush.bf16.msra.mxu0 %v788
    %1063 = vmatpush.bf16.msra.mxu0 %v784
    %1064 = vmatpush.bf16.msra.mxu0 %v780
    %1065 = vmatmul.bf16.gmra.mxu0 %v245
    %v1066 = vpop.f32.mrf.mxu0
    %v1067 = vadd.f32 %v382, %v1066
    %v1068 = vpop.f32.mrf.mxu0
    %1069 = vdwg.mxu0
    %1070 = vmatpush.bf16.msra.mxu0 %v840
    %1071 = vmatpush.bf16.msra.mxu0 %v836
    %1072 = vmatpush.bf16.msra.mxu0 %v832
    %1073 = vmatpush.bf16.msra.mxu0 %v828
    %1074 = vmatpush.bf16.msra.mxu0 %v824
    %1075 = vmatpush.bf16.msra.mxu0 %v820
    %1076 = vmatpush.bf16.msra.mxu0 %v816
    %1077 = vmatpush.bf16.msra.mxu0 %v812
    %1078 = vmatmul.bf16.gmra.mxu0 %v246
    %v1079 = vpop.f32.mrf.mxu0
    %v1080 = vadd.f32 %v1067, %v1079
    %v1081 = vpop.f32.mrf.mxu0
    %1082 = vdwg.mxu0
    %1083 = vmatpush.bf16.msra.mxu0 %v872
    %1084 = vmatpush.bf16.msra.mxu0 %v868
    %1085 = vmatpush.bf16.msra.mxu0 %v864
    %1086 = vmatpush.bf16.msra.mxu0 %v860
    %1087 = vmatpush.bf16.msra.mxu0 %v856
    %1088 = vmatpush.bf16.msra.mxu0 %v852
    %1089 = vmatpush.bf16.msra.mxu0 %v848
    %1090 = vmatpush.bf16.msra.mxu0 %v844
    %1091 = vmatmul.bf16.gmra.mxu0 %v247
    %v1092 = vpop.f32.mrf.mxu0
    %v1093 = vadd.f32 %v1080, %v1092
    %v1094 = vpop.f32.mrf.mxu0
    %1095 = vdwg.mxu0
    %1096 = vmatpush.bf16.msra.mxu0 %v904
    %1097 = vmatpush.bf16.msra.mxu0 %v900
    %1098 = vmatpush.bf16.msra.mxu0 %v896
    %1099 = vmatpush.bf16.msra.mxu0 %v892
    %1100 = vmatpush.bf16.msra.mxu0 %v888
    %1101 = vmatpush.bf16.msra.mxu0 %v884
    %1102 = vmatpush.bf16.msra.mxu0 %v880
    %1103 = vmatpush.bf16.msra.mxu0 %v876
    %1104 = vmatmul.bf16.gmra.mxu0 %v248
    %v1105 = vpop.f32.mrf.mxu0
    %v1106 = vadd.f32 %v1093, %v1105
    %v1107 = vpop.f32.mrf.mxu0
    %1108 = vdwg.mxu0
    %1109 = vmatpush.bf16.msra.mxu0 0
    %1110 = vmatpush.bf16.msra.mxu0 0
    %1111 = vmatpush.bf16.msra.mxu0 0
    %1112 = vmatpush.bf16.msra.mxu0 0
    %1113 = vmatpush.bf16.msra.mxu0 0
    %1114 = vmatpush.bf16.msra.mxu0 0
    %1115 = vmatpush.bf16.msra.mxu0 0
    %1116 = vmatpush.bf16.msra.mxu0 %v1046
    %1117 = vmatmul.bf16.gmra.mxu0 %v1042
    %v1118 = vpop.f32.mrf.mxu0
    %v1119 = vadd.f32 %v1106, %v1118
    %v1120 = vpop.f32.mrf.mxu0
    %1121 = vdwg.mxu0
    %1122 = vmatpush.bf16.msra.mxu0 %v809
    %1123 = vmatpush.bf16.msra.mxu0 %v805
    %1124 = vmatpush.bf16.msra.mxu0 %v801
    %1125 = vmatpush.bf16.msra.mxu0 %v797
    %1126 = vmatpush.bf16.msra.mxu0 %v793
    %1127 = vmatpush.bf16.msra.mxu0 %v789
    %1128 = vmatpush.bf16.msra.mxu0 %v785
    %1129 = vmatpush.bf16.msra.mxu0 %v781
    %1130 = vmatmul.bf16.gmra.mxu0 %v245
    %v1131 = vpop.f32.mrf.mxu0
    %v1132 = vadd.f32 %v383, %v1131
    %v1133 = vpop.f32.mrf.mxu0
    %1134 = vdwg.mxu0
    %1135 = vmatpush.bf16.msra.mxu0 %v841
    %1136 = vmatpush.bf16.msra.mxu0 %v837
    %1137 = vmatpush.bf16.msra.mxu0 %v833
    %1138 = vmatpush.bf16.msra.mxu0 %v829
    %1139 = vmatpush.bf16.msra.mxu0 %v825
    %1140 = vmatpush.bf16.msra.mxu0 %v821
    %1141 = vmatpush.bf16.msra.mxu0 %v817
    %1142 = vmatpush.bf16.msra.mxu0 %v813
    %1143 = vmatmul.bf16.gmra.mxu0 %v246
    %v1144 = vpop.f32.mrf.mxu0
    %v1145 = vadd.f32 %v1132, %v1144
    %v1146 = vpop.f32.mrf.mxu0
    %1147 = vdwg.mxu0
    %1148 = vmatpush.bf16.msra.mxu0 %v873
    %1149 = vmatpush.bf16.msra.mxu0 %v869
    %1150 = vmatpush.bf16.msra.mxu0 %v865
    %1151 = vmatpush.bf16.msra.mxu0 %v861
    %1152 = vmatpush.bf16.msra.mxu0 %v857
    %1153 = vmatpush.bf16.msra.mxu0 %v853
    %1154 = vmatpush.bf16.msra.mxu0 %v849
    %1155 = vmatpush.bf16.msra.mxu0 %v845
    %1156 = vmatmul.bf16.gmra.mxu0 %v247
    %v1157 = vpop.f32.mrf.mxu0
    %v1158 = vadd.f32 %v1145, %v1157
    %v1159 = vpop.f32.mrf.mxu0
    %1160 = vdwg.mxu0
    %1161 = vmatpush.bf16.msra.mxu0 %v905
    %1162 = vmatpush.bf16.msra.mxu0 %v901
    %1163 = vmatpush.bf16.msra.mxu0 %v897
    %1164 = vmatpush.bf16.msra.mxu0 %v893
    %1165 = vmatpush.bf16.msra.mxu0 %v889
    %1166 = vmatpush.bf16.msra.mxu0 %v885
    %1167 = vmatpush.bf16.msra.mxu0 %v881
    %1168 = vmatpush.bf16.msra.mxu0 %v877
    %1169 = vmatmul.bf16.gmra.mxu0 %v248
    %v1170 = vpop.f32.mrf.mxu0
    %v1171 = vadd.f32 %v1158, %v1170
    %v1172 = vpop.f32.mrf.mxu0
    %1173 = vdwg.mxu0
    %1174 = vmatpush.bf16.msra.mxu0 0
    %1175 = vmatpush.bf16.msra.mxu0 0
    %1176 = vmatpush.bf16.msra.mxu0 0
    %1177 = vmatpush.bf16.msra.mxu0 0
    %1178 = vmatpush.bf16.msra.mxu0 0
    %1179 = vmatpush.bf16.msra.mxu0 0
    %1180 = vmatpush.bf16.msra.mxu0 0
    %1181 = vmatpush.bf16.msra.mxu0 %v1049
    %1182 = vmatmul.bf16.gmra.mxu0 %v1042
    %v1183 = vpop.f32.mrf.mxu0
    %v1184 = vadd.f32 %v1171, %v1183
    %v1185 = vpop.f32.mrf.mxu0
    %1186 = vdwg.mxu0
    %1187 = vmatpush.bf16.msra.mxu0 %v810
    %1188 = vmatpush.bf16.msra.mxu0 %v806
    %1189 = vmatpush.bf16.msra.mxu0 %v802
    %1190 = vmatpush.bf16.msra.mxu0 %v798
    %1191 = vmatpush.bf16.msra.mxu0 %v794
    %1192 = vmatpush.bf16.msra.mxu0 %v790
    %1193 = vmatpush.bf16.msra.mxu0 %v786
    %1194 = vmatpush.bf16.msra.mxu0 %v782
    %1195 = vmatmul.bf16.gmra.mxu0 %v245
    %v1196 = vpop.f32.mrf.mxu0
    %v1197 = vadd.f32 %v384, %v1196
    %v1198 = vpop.f32.mrf.mxu0
    %1199 = vdwg.mxu0
    %1200 = vmatpush.bf16.msra.mxu0 %v842
    %1201 = vmatpush.bf16.msra.mxu0 %v838
    %1202 = vmatpush.bf16.msra.mxu0 %v834
    %1203 = vmatpush.bf16.msra.mxu0 %v830
    %1204 = vmatpush.bf16.msra.mxu0 %v826
    %1205 = vmatpush.bf16.msra.mxu0 %v822
    %1206 = vmatpush.bf16.msra.mxu0 %v818
    %1207 = vmatpush.bf16.msra.mxu0 %v814
    %1208 = vmatmul.bf16.gmra.mxu0 %v246
    %v1209 = vpop.f32.mrf.mxu0
    %v1210 = vadd.f32 %v1197, %v1209
    %v1211 = vpop.f32.mrf.mxu0
    %1212 = vdwg.mxu0
    %1213 = vmatpush.bf16.msra.mxu0 %v874
    %1214 = vmatpush.bf16.msra.mxu0 %v870
    %1215 = vmatpush.bf16.msra.mxu0 %v866
    %1216 = vmatpush.bf16.msra.mxu0 %v862
    %1217 = vmatpush.bf16.msra.mxu0 %v858
    %1218 = vmatpush.bf16.msra.mxu0 %v854
    %1219 = vmatpush.bf16.msra.mxu0 %v850
    %1220 = vmatpush.bf16.msra.mxu0 %v846
    %1221 = vmatmul.bf16.gmra.mxu0 %v247
    %v1222 = vpop.f32.mrf.mxu0
    %v1223 = vadd.f32 %v1210, %v1222
    %v1224 = vpop.f32.mrf.mxu0
    %1225 = vdwg.mxu0
    %1226 = vmatpush.bf16.msra.mxu0 %v906
    %1227 = vmatpush.bf16.msra.mxu0 %v902
    %1228 = vmatpush.bf16.msra.mxu0 %v898
    %1229 = vmatpush.bf16.msra.mxu0 %v894
    %1230 = vmatpush.bf16.msra.mxu0 %v890
    %1231 = vmatpush.bf16.msra.mxu0 %v886
    %1232 = vmatpush.bf16.msra.mxu0 %v882
    %1233 = vmatpush.bf16.msra.mxu0 %v878
    %1234 = vmatmul.bf16.gmra.mxu0 %v248
    %v1235 = vpop.f32.mrf.mxu0
    %v1236 = vadd.f32 %v1223, %v1235
    %v1237 = vpop.f32.mrf.mxu0
    %1238 = vdwg.mxu0
    %1239 = vmatpush.bf16.msra.mxu0 0
    %1240 = vmatpush.bf16.msra.mxu0 0
    %1241 = vmatpush.bf16.msra.mxu0 0
    %1242 = vmatpush.bf16.msra.mxu0 0
    %1243 = vmatpush.bf16.msra.mxu0 0
    %1244 = vmatpush.bf16.msra.mxu0 0
    %1245 = vmatpush.bf16.msra.mxu0 0
    %1246 = vmatpush.bf16.msra.mxu0 %v1052
    %1247 = vmatmul.bf16.gmra.mxu0 %v1042
    %v1248 = vpop.f32.mrf.mxu0
    %v1249 = vadd.f32 %v1236, %v1248
    %v1250 = vpop.f32.mrf.mxu0
    %1251 = vdwg.mxu0
    %1252 = vmatpush.bf16.msra.mxu0 %v811
    %1253 = vmatpush.bf16.msra.mxu0 %v807
    %1254 = vmatpush.bf16.msra.mxu0 %v803
    %1255 = vmatpush.bf16.msra.mxu0 %v799
    %1256 = vmatpush.bf16.msra.mxu0 %v795
    %1257 = vmatpush.bf16.msra.mxu0 %v791
    %1258 = vmatpush.bf16.msra.mxu0 %v787
    %1259 = vmatpush.bf16.msra.mxu0 %v783
    %1260 = vmatmul.bf16.gmra.mxu0 %v245
    %v1261 = vpop.f32.mrf.mxu0
    %v1262 = vadd.f32 %v385, %v1261
    %v1263 = vpop.f32.mrf.mxu0
    %1264 = vdwg.mxu0
    %1265 = vmatpush.bf16.msra.mxu0 %v843
    %1266 = vmatpush.bf16.msra.mxu0 %v839
    %1267 = vmatpush.bf16.msra.mxu0 %v835
    %1268 = vmatpush.bf16.msra.mxu0 %v831
    %1269 = vmatpush.bf16.msra.mxu0 %v827
    %1270 = vmatpush.bf16.msra.mxu0 %v823
    %1271 = vmatpush.bf16.msra.mxu0 %v819
    %1272 = vmatpush.bf16.msra.mxu0 %v815
    %1273 = vmatmul.bf16.gmra.mxu0 %v246
    %v1274 = vpop.f32.mrf.mxu0
    %v1275 = vadd.f32 %v1262, %v1274
    %v1276 = vpop.f32.mrf.mxu0
    %1277 = vdwg.mxu0
    %1278 = vmatpush.bf16.msra.mxu0 %v875
    %1279 = vmatpush.bf16.msra.mxu0 %v871
    %1280 = vmatpush.bf16.msra.mxu0 %v867
    %1281 = vmatpush.bf16.msra.mxu0 %v863
    %1282 = vmatpush.bf16.msra.mxu0 %v859
    %1283 = vmatpush.bf16.msra.mxu0 %v855
    %1284 = vmatpush.bf16.msra.mxu0 %v851
    %1285 = vmatpush.bf16.msra.mxu0 %v847
    %1286 = vmatmul.bf16.gmra.mxu0 %v247
    %v1287 = vpop.f32.mrf.mxu0
    %v1288 = vadd.f32 %v1275, %v1287
    %v1289 = vpop.f32.mrf.mxu0
    %1290 = vdwg.mxu0
    %1291 = vmatpush.bf16.msra.mxu0 %v907
    %1292 = vmatpush.bf16.msra.mxu0 %v903
    %1293 = vmatpush.bf16.msra.mxu0 %v899
    %1294 = vmatpush.bf16.msra.mxu0 %v895
    %1295 = vmatpush.bf16.msra.mxu0 %v891
    %1296 = vmatpush.bf16.msra.mxu0 %v887
    %1297 = vmatpush.bf16.msra.mxu0 %v883
    %1298 = vmatpush.bf16.msra.mxu0 %v879
    %1299 = vmatmul.bf16.gmra.mxu0 %v248
    %v1300 = vpop.f32.mrf.mxu0
    %v1301 = vadd.f32 %v1288, %v1300
    %v1302 = vpop.f32.mrf.mxu0
    %1303 = vdwg.mxu0
    %1304 = vmatpush.bf16.msra.mxu0 0
    %1305 = vmatpush.bf16.msra.mxu0 0
    %1306 = vmatpush.bf16.msra.mxu0 0
    %1307 = vmatpush.bf16.msra.mxu0 0
    %1308 = vmatpush.bf16.msra.mxu0 0
    %1309 = vmatpush.bf16.msra.mxu0 0
    %1310 = vmatpush.bf16.msra.mxu0 0
    %1311 = vmatpush.bf16.msra.mxu0 %v1055
    %1312 = vmatmul.bf16.gmra.mxu0 %v1042
    %v1313 = vpop.f32.mrf.mxu0
    %v1314 = vadd.f32 %v1301, %v1313
    %v1315 = vpop.f32.mrf.mxu0
    %1316 = vdwg.mxu0
    %v1317 = vmax.f32 %v1119, 0.0
    %v1318 = vmax.f32 %v1184, 0.0
    %v1319 = vmax.f32 %v1249, 0.0
    %v1320 = vmax.f32 %v1314, 0.0
    %v1325 = vrot.slane %v1318, 6
    %v1326 = vrot.slane %v1319, 4
    %v1327 = vrot.slane %v1320, 2
    %vm1328 = vcmask 1041408
    %v1329 = vsel %vm1328, %v1317, %v1325
    %vm1330 = vcmask 1045508
    %v1331 = vsel %vm1330, %v1326, %v1327
    %v1332 = vsel %vm1044, %v1329, %v1331
    %1334 = vst [vmem:[%s5] sm:$0xff] %v1332
    // Predicated region
    $region42: #{run_output_reshape.1} parent=1 // pred_check
      _
    $region43: #{run_output_reshape.1} parent=1 // pred_check_branch
      %1336 = sbr.rel (0) target = $region45
    $region44: #{run_output_reshape.1} parent=1 // pred_region
      _
    $region45: #{run_output_reshape.1} parent=1 // pred_fallthru
      _
    // Predicated region
    $region46: #{run_output_reshape.1} parent=1 // pred_check
      _
    $region47: #{run_output_reshape.1} parent=1 // pred_check_branch
      %1338 = sbr.rel (0) target = $region49
    $region48: #{run_output_reshape.1} parent=1 // pred_region
      _
    $region49: #{run_output_reshape.1} parent=1 // pred_fallthru
      _
    %1339 = vsyncpa [#allocation3], 1
    %1340 = vsyncpa [#allocation5], 1
    %1341 = vsyncpa [#allocation8], 1

</llo_original>
